<compile_context>
chip_gen: v7x
topology: tpu7x:2x2x1
jax: 0.10.0
libtpu: 0.0.40
codegen_flags: <defaults>
</compile_context>

<pallas_src>
import functools

import jax
import jax.numpy as jnp
from jax.experimental import pallas as pl
from jax.experimental.pallas import tpu as pltpu


def _patchify_band_kernel(x_ref, o_ref, *, patch_size, stride, nw):
    """Extract one horizontal band (row) of patches.

    x_ref: (1, C, H, W)    -- full image; its block index depends only on b,
                              so it stays resident across the nh grid axis.
    o_ref: (1, C, 1, 1, L) -- lane-dense band, L = nw * P * P, flat order
                              (iw, ph, pw) == row-major (n, P, P) for this band.
    """
    P = patch_size
    ih = pl.program_id(1)
    h0 = pl.multiple_of(ih * stride, stride)
    # Input rows feeding this row of patches: (C, P, W).
    band = x_ref[0, :, pl.ds(h0, P), :]
    # Gather the nw horizontal windows and flatten them in registers.  All
    # slices are static, so this is VPU/XLU shuffle work that stays off the
    # single vector-store slot; the store below is one wide lane-dense write
    # instead of nw*P masked P-lane writes.
    pieces = []
    for iw in range(nw):
        w0 = iw * stride
        for ph in range(P):
            pieces.append(band[:, ph, w0:w0 + P])        # (C, P)
    flat = jnp.concatenate(pieces, axis=-1)              # (C, nw*P*P)
    o_ref[0, :, 0, 0, :] = flat


def image_patchify(x, patch_size, stride):
    """x: [B, C, H, W] -> (voxel [B, C, N, P, P], batch_indices [B*N])."""
    B, C, H, W = x.shape
    P = patch_size
    nh = (H - P) // stride + 1
    nw = (W - P) // stride + 1
    N = nh * nw

    if stride == P:
        # Non-overlapping patches (common ViT case): pure layout transform.
        # Let XLA do the reshape+transpose at near-HBM roofline.
        xc = x[:, :, :nh * P, :nw * P]
        voxel = xc.reshape(B, C, nh, P, nw, P).transpose(0, 1, 2, 4, 3, 5)
        voxel = voxel.reshape(B, C, N, P, P)
    else:
        L = nw * P * P
        isz = jnp.dtype(x.dtype).itemsize
        # Double-buffered full image + double-buffered output band (+ slack).
        vmem_need = 2 * (C * H * W + C * L) * isz + (1 << 20)
        vmem_limit = int(min(max(vmem_need, 32 << 20), 64 << 20))

        kernel = functools.partial(
            _patchify_band_kernel, patch_size=P, stride=stride, nw=nw)

        out_flat = pl.pallas_call(
            kernel,
            # (B, C, nh, 1, L): trailing dummy dim keeps the block's last two
            # dims equal to the full array dims (TPU (8,128) block rule) while
            # still tiling over nh.  Row-major identical to (B, C, N, P, P),
            # so the wrapper reshape below is free.
            out_shape=jax.ShapeDtypeStruct((B, C, nh, 1, L), x.dtype),
            grid_spec=pltpu.PrefetchScalarGridSpec(
                num_scalar_prefetch=0,
                grid=(B, nh),
                in_specs=[
                    # Full image per b; block index independent of ih, so it
                    # is DMA'd once per image and revisited across bands.
                    pl.BlockSpec((1, C, H, W), lambda b, ih: (b, 0, 0, 0)),
                ],
                out_specs=pl.BlockSpec(
                    (1, C, 1, 1, L), lambda b, ih: (b, 0, ih, 0, 0)),
            ),
            compiler_params=pltpu.CompilerParams(
                dimension_semantics=("parallel", "parallel"),
                vmem_limit_bytes=vmem_limit,
            ),
            cost_estimate=pl.CostEstimate(
                flops=0,
                transcendentals=0,
                bytes_accessed=(B * C * H * W + B * C * N * P * P) * isz,
            ),
        )(x)
        voxel = out_flat.reshape(B, C, N, P, P)   # free: row-major contiguous

    # TODO(synk): exact contents of `batch_indices` depend on the opaque
    # `batch_patching` helper; per-patch source-image indices (length B*N,
    # i.e. repeat over the patch axis) is the most common convention.
    batch_indices = jnp.repeat(jnp.arange(B, dtype=jnp.int32), N)
    return voxel, batch_indices


def _reference_patchify(x, patch_size, stride):
    """Pure-JAX reference reproducing the torch semantics."""
    B, C, H, W = x.shape
    nh = (H - patch_size) // stride + 1
    nw = (W - patch_size) // stride + 1
    patches = []
    for ih in range(nh):
        for iw in range(nw):
            h0, w0 = ih * stride, iw * stride
            patches.append(x[:, :, h0:h0 + patch_size, w0:w0 + patch_size])
    # stack over patch axis -> [B, C, N, P, P]
    return jnp.stack(patches, axis=2)


if __name__ == "__main__":
    key = jax.random.PRNGKey(0)

    batch, channels, spatial = 2, 4, 16
    patch_size, stride = 8, 4

    x = jax.random.normal(key, (batch, channels, spatial, spatial),
                          dtype=jnp.float32)

    # Overlapping-stride path (Pallas kernel).
    voxel, batch_indices = image_patchify(x, patch_size, stride)
    voxel = jax.block_until_ready(voxel)
    batch_indices = jax.block_until_ready(batch_indices)

    ref = _reference_patchify(x, patch_size, stride)
    assert voxel.shape == ref.shape, (voxel.shape, ref.shape)
    assert voxel.dtype == jnp.float32
    assert jnp.allclose(voxel, ref), "Pallas patchify mismatch vs reference"
    n_patches = ref.shape[2]
    assert batch_indices.shape == (batch * n_patches,)

    # Non-overlapping fast path (stride == patch_size): pure XLA reshape.
    voxel2, batch_indices2 = image_patchify(x, patch_size, patch_size)
    voxel2 = jax.block_until_ready(voxel2)
    ref2 = _reference_patchify(x, patch_size, patch_size)
    assert voxel2.shape == ref2.shape, (voxel2.shape, ref2.shape)
    assert jnp.allclose(voxel2, ref2), "fast-path patchify mismatch"
    assert batch_indices2.shape == (batch * ref2.shape[2],)

    print("KERNEL_OK")
</pallas_src>

<mosaic_0001>
module attributes {stable_mosaic.version = 11 : i64} {
  func.func @_patchify_band_kernel(%arg0: i32, %arg1: i32, %arg2: memref<1x4x16x16xf32, #tpu.memory_space<vmem>>, %arg3: memref<1x4x1x1x192xf32, #tpu.memory_space<vmem>>) attributes {dimension_semantics = [#tpu.dimension_semantics<parallel>, #tpu.dimension_semantics<parallel>], iteration_bounds = array<i64: 2, 3>, scalar_prefetch = 0 : i64, scratch_operands = 0 : i64, tpu.core_type = #tpu.core_type<tc>, window_params = [{transform_indices = @transform_0, window_bounds = array<i64: 1, 4, 16, 16>}, {transform_indices = @transform_1, window_bounds = array<i64: 1, 4, 1, 1, 192>}]} {
    %c4_i32 = arith.constant 4 : i32
    %0 = arith.muli %arg1, %c4_i32 : i32
    %1 = tpu.assume_multiple %0, 4 : i32
    %c0 = arith.constant 0 : index
    %c0_0 = arith.constant 0 : index
    %2 = arith.index_cast %1 : i32 to index
    %c0_1 = arith.constant 0 : index
    %3 = vector.load %arg2[%c0, %c0_0, %2, %c0_1] : memref<1x4x16x16xf32, #tpu.memory_space<vmem>>, vector<1x4x8x16xf32>
    %4 = vector.shape_cast %3 : vector<1x4x8x16xf32> to vector<4x8x16xf32>
    %5 = vector.extract_strided_slice %4 {offsets = [0, 0, 0], sizes = [4, 1, 8], strides = [1, 1, 1]} : vector<4x8x16xf32> to vector<4x1x8xf32>
    %6 = vector.shape_cast %5 : vector<4x1x8xf32> to vector<4x8xf32>
    %7 = vector.extract_strided_slice %4 {offsets = [0, 1, 0], sizes = [4, 1, 8], strides = [1, 1, 1]} : vector<4x8x16xf32> to vector<4x1x8xf32>
    %8 = vector.shape_cast %7 : vector<4x1x8xf32> to vector<4x8xf32>
    %9 = vector.extract_strided_slice %4 {offsets = [0, 2, 0], sizes = [4, 1, 8], strides = [1, 1, 1]} : vector<4x8x16xf32> to vector<4x1x8xf32>
    %10 = vector.shape_cast %9 : vector<4x1x8xf32> to vector<4x8xf32>
    %11 = vector.extract_strided_slice %4 {offsets = [0, 3, 0], sizes = [4, 1, 8], strides = [1, 1, 1]} : vector<4x8x16xf32> to vector<4x1x8xf32>
    %12 = vector.shape_cast %11 : vector<4x1x8xf32> to vector<4x8xf32>
    %13 = vector.extract_strided_slice %4 {offsets = [0, 4, 0], sizes = [4, 1, 8], strides = [1, 1, 1]} : vector<4x8x16xf32> to vector<4x1x8xf32>
    %14 = vector.shape_cast %13 : vector<4x1x8xf32> to vector<4x8xf32>
    %15 = vector.extract_strided_slice %4 {offsets = [0, 5, 0], sizes = [4, 1, 8], strides = [1, 1, 1]} : vector<4x8x16xf32> to vector<4x1x8xf32>
    %16 = vector.shape_cast %15 : vector<4x1x8xf32> to vector<4x8xf32>
    %17 = vector.extract_strided_slice %4 {offsets = [0, 6, 0], sizes = [4, 1, 8], strides = [1, 1, 1]} : vector<4x8x16xf32> to vector<4x1x8xf32>
    %18 = vector.shape_cast %17 : vector<4x1x8xf32> to vector<4x8xf32>
    %19 = vector.extract_strided_slice %4 {offsets = [0, 7, 0], sizes = [4, 1, 8], strides = [1, 1, 1]} : vector<4x8x16xf32> to vector<4x1x8xf32>
    %20 = vector.shape_cast %19 : vector<4x1x8xf32> to vector<4x8xf32>
    %21 = vector.extract_strided_slice %4 {offsets = [0, 0, 4], sizes = [4, 1, 8], strides = [1, 1, 1]} : vector<4x8x16xf32> to vector<4x1x8xf32>
    %22 = vector.shape_cast %21 : vector<4x1x8xf32> to vector<4x8xf32>
    %23 = vector.extract_strided_slice %4 {offsets = [0, 1, 4], sizes = [4, 1, 8], strides = [1, 1, 1]} : vector<4x8x16xf32> to vector<4x1x8xf32>
    %24 = vector.shape_cast %23 : vector<4x1x8xf32> to vector<4x8xf32>
    %25 = vector.extract_strided_slice %4 {offsets = [0, 2, 4], sizes = [4, 1, 8], strides = [1, 1, 1]} : vector<4x8x16xf32> to vector<4x1x8xf32>
    %26 = vector.shape_cast %25 : vector<4x1x8xf32> to vector<4x8xf32>
    %27 = vector.extract_strided_slice %4 {offsets = [0, 3, 4], sizes = [4, 1, 8], strides = [1, 1, 1]} : vector<4x8x16xf32> to vector<4x1x8xf32>
    %28 = vector.shape_cast %27 : vector<4x1x8xf32> to vector<4x8xf32>
    %29 = vector.extract_strided_slice %4 {offsets = [0, 4, 4], sizes = [4, 1, 8], strides = [1, 1, 1]} : vector<4x8x16xf32> to vector<4x1x8xf32>
    %30 = vector.shape_cast %29 : vector<4x1x8xf32> to vector<4x8xf32>
    %31 = vector.extract_strided_slice %4 {offsets = [0, 5, 4], sizes = [4, 1, 8], strides = [1, 1, 1]} : vector<4x8x16xf32> to vector<4x1x8xf32>
    %32 = vector.shape_cast %31 : vector<4x1x8xf32> to vector<4x8xf32>
    %33 = vector.extract_strided_slice %4 {offsets = [0, 6, 4], sizes = [4, 1, 8], strides = [1, 1, 1]} : vector<4x8x16xf32> to vector<4x1x8xf32>
    %34 = vector.shape_cast %33 : vector<4x1x8xf32> to vector<4x8xf32>
    %35 = vector.extract_strided_slice %4 {offsets = [0, 7, 4], sizes = [4, 1, 8], strides = [1, 1, 1]} : vector<4x8x16xf32> to vector<4x1x8xf32>
    %36 = vector.shape_cast %35 : vector<4x1x8xf32> to vector<4x8xf32>
    %37 = vector.extract_strided_slice %4 {offsets = [0, 0, 8], sizes = [4, 1, 8], strides = [1, 1, 1]} : vector<4x8x16xf32> to vector<4x1x8xf32>
    %38 = vector.shape_cast %37 : vector<4x1x8xf32> to vector<4x8xf32>
    %39 = vector.extract_strided_slice %4 {offsets = [0, 1, 8], sizes = [4, 1, 8], strides = [1, 1, 1]} : vector<4x8x16xf32> to vector<4x1x8xf32>
    %40 = vector.shape_cast %39 : vector<4x1x8xf32> to vector<4x8xf32>
    %41 = vector.extract_strided_slice %4 {offsets = [0, 2, 8], sizes = [4, 1, 8], strides = [1, 1, 1]} : vector<4x8x16xf32> to vector<4x1x8xf32>
    %42 = vector.shape_cast %41 : vector<4x1x8xf32> to vector<4x8xf32>
    %43 = vector.extract_strided_slice %4 {offsets = [0, 3, 8], sizes = [4, 1, 8], strides = [1, 1, 1]} : vector<4x8x16xf32> to vector<4x1x8xf32>
    %44 = vector.shape_cast %43 : vector<4x1x8xf32> to vector<4x8xf32>
    %45 = vector.extract_strided_slice %4 {offsets = [0, 4, 8], sizes = [4, 1, 8], strides = [1, 1, 1]} : vector<4x8x16xf32> to vector<4x1x8xf32>
    %46 = vector.shape_cast %45 : vector<4x1x8xf32> to vector<4x8xf32>
    %47 = vector.extract_strided_slice %4 {offsets = [0, 5, 8], sizes = [4, 1, 8], strides = [1, 1, 1]} : vector<4x8x16xf32> to vector<4x1x8xf32>
    %48 = vector.shape_cast %47 : vector<4x1x8xf32> to vector<4x8xf32>
    %49 = vector.extract_strided_slice %4 {offsets = [0, 6, 8], sizes = [4, 1, 8], strides = [1, 1, 1]} : vector<4x8x16xf32> to vector<4x1x8xf32>
    %50 = vector.shape_cast %49 : vector<4x1x8xf32> to vector<4x8xf32>
    %51 = vector.extract_strided_slice %4 {offsets = [0, 7, 8], sizes = [4, 1, 8], strides = [1, 1, 1]} : vector<4x8x16xf32> to vector<4x1x8xf32>
    %52 = vector.shape_cast %51 : vector<4x1x8xf32> to vector<4x8xf32>
    %53 = tpu.concatenate %6, %8, %10, %12, %14, %16, %18, %20, %22, %24, %26, %28, %30, %32, %34, %36 in 1 : vector<4x8xf32>, vector<4x8xf32>, vector<4x8xf32>, vector<4x8xf32>, vector<4x8xf32>, vector<4x8xf32>, vector<4x8xf32>, vector<4x8xf32>, vector<4x8xf32>, vector<4x8xf32>, vector<4x8xf32>, vector<4x8xf32>, vector<4x8xf32>, vector<4x8xf32>, vector<4x8xf32>, vector<4x8xf32> -> vector<4x128xf32>
    %54 = tpu.concatenate %38, %40, %42, %44, %46, %48, %50, %52 in 1 : vector<4x8xf32>, vector<4x8xf32>, vector<4x8xf32>, vector<4x8xf32>, vector<4x8xf32>, vector<4x8xf32>, vector<4x8xf32>, vector<4x8xf32> -> vector<4x64xf32>
    %55 = tpu.concatenate %53, %54 in 1 : vector<4x128xf32>, vector<4x64xf32> -> vector<4x192xf32>
    %c0_2 = arith.constant 0 : index
    %c0_3 = arith.constant 0 : index
    %c0_4 = arith.constant 0 : index
    %c0_5 = arith.constant 0 : index
    %c0_6 = arith.constant 0 : index
    %56 = vector.load %arg3[%c0_2, %c0_3, %c0_4, %c0_5, %c0_6] : memref<1x4x1x1x192xf32, #tpu.memory_space<vmem>>, vector<1x4x1x1x192xf32>
    %57 = vector.shape_cast %56 : vector<1x4x1x1x192xf32> to vector<4x192xf32>
    %58 = vector.shape_cast %55 : vector<4x192xf32> to vector<1x4x1x1x192xf32>
    tpu.vector_store %arg3[%c0_2, %c0_3, %c0_4, %c0_5, %c0_6], %58 {strides = array<i32>} : memref<1x4x1x1x192xf32, #tpu.memory_space<vmem>>, vector<1x4x1x1x192xf32>,
    return
  }
  func.func @transform_0(%arg0: i32, %arg1: i32) -> (i32, i32, i32, i32) {
    %c0_i32 = arith.constant 0 : i32
    %c0_i32_0 = arith.constant 0 : i32
    %c0_i32_1 = arith.constant 0 : i32
    %c0_i32_2 = arith.constant 0 : i32
    return %arg0, %c0_i32, %c0_i32_0, %c0_i32_1 : i32, i32, i32, i32
  }
  func.func @transform_1(%arg0: i32, %arg1: i32) -> (i32, i32, i32, i32, i32) {
    %c0_i32 = arith.constant 0 : i32
    %c0_i32_0 = arith.constant 0 : i32
    %c0_i32_1 = arith.constant 0 : i32
    %c0_i32_2 = arith.constant 0 : i32
    return %arg0, %c0_i32, %arg1, %c0_i32_0, %c0_i32_1 : i32, i32, i32, i32, i32
  }
}

</mosaic_0001>

<llo_original>
// kernel: tpu_custom_call.1
$region0: #{tpu_custom_call.1}
  #allocation0 [shape = 'u32[]', space=smem, size = 0x4, offset = 0x4, fixed_abs, tag = 'smem constant byte address 0x4 - core index']
  #allocation1 [shape = 'u32[144,128]{1,0:T(1,128)}', space=vmem, size = 0x12000, scoped, tag = 'internal scratch']
  %s0 = inlined_call_operand.hbm [shape: f32[2,4,16,16], index: 0, kind: input, shape index: {}]
  %s1 = inlined_call_operand.hbm [shape: f32[2,4,3,1,192], index: 1, kind: output, shape index: {}]
  %s2 = sld [smem:[#allocation0]]
  $region41: #{tpu_custom_call.1} parent=0
    _
  %s4 = ssub.s32 1, %s2
  %s5 = scalar_select 0, %s4, %s2
  $region1: #{tpu_custom_call.1} parent=0
    #allocation2 [shape = 'u8[65536]{0}', space=vmem, size = 0x10000, scoped, tag = 'input window, operand 0']
    #allocation3 [shape = 's32[2]{0}', space=sflag, size = 0x8, scoped, tag = 'scoped memory for tpu_custom_call.1']
    #allocation4 [shape = 's32[2]{0}', space=sflag, size = 0x8, scoped, tag = 'scoped memory for tpu_custom_call.1']
    #allocation5 [shape = 'u8[8192]{0}', space=vmem, size = 0x2000, scoped, tag = 'output window, operand 0']
    %6 = vsyncpa [#allocation3], 0
    %s7 = scalar_lea.sflag [#allocation3], 1
    %8 = vsyncpa %s7, 0
    %9 = vsyncpa [#allocation4], 0
    %s10 = scalar_lea.sflag [#allocation4], 1
    %11 = vsyncpa %s10, 0
    loop: start=0, step=1, limit=8
    $region2: #{tpu_custom_call.1} parent=1 // loop_pre_header
      _
    $region3: #{tpu_custom_call.1} parent=1 // loop_header
      %s13 = sphi 0, %s17
      %p14 = scmp.ge.s32.totalorder %s13, 8
      %s20 = sphi 0, %s32
      %s21 = sphi 0, %s28
      %s22 = sphi 0, %s20
      %s23 = sphi 0, %s21
      %s24 = sphi 0, %s22
      %s25 = sphi 0, %s23
      %s35 = sphi 0, %s37
      %s38 = sphi 0, %s35
      %s39 = sphi 0, %s38
      %s55 = sphi 0, %s39
      %s63 = sphi 0, %s65
      %s66 = sphi 0, %s63
      %s67 = sphi 0, %s66
      %s83 = sphi 0, %s67
    $region4: #{tpu_custom_call.1} parent=1 // loop_header_branch
      %16 = sbr.rel (%p14) target = $region8
    $region5: #{tpu_custom_call.1} parent=1 // loop_body
      %s18 = ssub.s32 %s13, 1
      %s19 = ssub.s32 %s13, 2
      %s26 = sadd.s32 1, %s21
      %p27 = scmp.ge.s32.totalorder %s26, 3
      %s28 = scalar_select %p27, 0, %s26
      %s29 = sadd.s32 1, %s20
      %s30 = scalar_select %p27, %s29, %s20
      %p31 = scmp.ge.s32.totalorder %s30, 2
      %s32 = scalar_select %p31, 0, %s30
      %s33 = ssub.s32 %s20, %s32
      %p34 = scmp.eq.s32.totalorder %s33, 0
      %s36 = sadd.s32 %s35, 1
      %s37 = scalar_select %p34, %s35, %s36
      %p40 = pneg %p34
      %p41 = scmp.eq.s32.totalorder %s13, 5
      %p42 = por %p40, %p41
      %p43 = scmp.ne.s32.totalorder %s35, %s38
      %p44 = scmp.eq.s32.totalorder %s13, 0
      %p45 = por %p43, %p44
      %p46 = scmp.ne.s32.totalorder %s35, %s38
      %p47 = scmp.eq.s32.totalorder %s18, 5
      %p48 = por %p46, %p47
      %p49 = scmp.ne.s32.totalorder %s38, %s39
      %p50 = scmp.eq.s32.totalorder %s18, 0
      %p51 = por %p49, %p50
      %p52 = scmp.ne.s32.totalorder %s38, %s39
      %p53 = scmp.eq.s32.totalorder %s19, 5
      %p54 = por %p52, %p53
      %p56 = scmp.ne.s32.totalorder %s39, %s55
      %p57 = scmp.eq.s32.totalorder %s19, 0
      %p58 = por %p56, %p57
      %s59 = ssub.s32 %s20, %s32
      %s60 = ssub.s32 %s21, %s28
      %s61 = sor.u32 %s59, %s60
      %p62 = scmp.eq.s32.totalorder %s61, 0
      %s64 = sadd.s32 %s63, 1
      %s65 = scalar_select %p62, %s63, %s64
      %p68 = pneg %p62
      %p69 = scmp.eq.s32.totalorder %s13, 5
      %p70 = por %p68, %p69
      %p71 = scmp.ne.s32.totalorder %s63, %s66
      %p72 = scmp.eq.s32.totalorder %s13, 0
      %p73 = por %p71, %p72
      %p74 = scmp.ne.s32.totalorder %s63, %s66
      %p75 = scmp.eq.s32.totalorder %s18, 5
      %p76 = por %p74, %p75
      %p77 = scmp.ne.s32.totalorder %s66, %s67
      %p78 = scmp.eq.s32.totalorder %s18, 0
      %p79 = por %p77, %p78
      %p80 = scmp.ne.s32.totalorder %s66, %s67
      %p81 = scmp.eq.s32.totalorder %s19, 5
      %p82 = por %p80, %p81
      %p84 = scmp.ne.s32.totalorder %s67, %s83
      %p85 = scmp.eq.s32.totalorder %s19, 0
      %p86 = por %p84, %p85
      %p87 = scmp.le.s32.totalorder 1, %s13
      %p88 = scmp.lt.s32.totalorder %s13, 7
      %p89 = pnand %p87, %p88
      %p90 = pneg %p89
      // Predicated region
      $region9: #{tpu_custom_call.1} parent=5 // pred_check
        _
      $region10: #{tpu_custom_call.1} parent=5 // pred_check_branch
        %92 = sbr.rel (%p89) target = $region12
      $region11: #{tpu_custom_call.1} parent=5 // pred_region
        %s93 = ssub.s32 %s13, 1
      $region12: #{tpu_custom_call.1} parent=5 // pred_fallthru
        _
      %p94 = scmp.lt.s32.totalorder %s13, 6
      // Predicated region
      $region13: #{tpu_custom_call.1} parent=5 // pred_check
        %p95 = pneg %p94
      $region14: #{tpu_custom_call.1} parent=5 // pred_check_branch
        %97 = sbr.rel (%p95) target = $region16
      $region15: #{tpu_custom_call.1} parent=5 // pred_region
        // Predicated region
        $region17: #{tpu_custom_call.1} parent=15 // pred_check
          %p98 = pneg %p45
        $region18: #{tpu_custom_call.1} parent=15 // pred_check_branch
          %100 = sbr.rel (%p98) target = $region20
        $region19: #{tpu_custom_call.1} parent=15 // pred_region
          %s101 = sand.u32 %s35, 1
          %s102 = scalar_lea.sflag [#allocation3], %s101
          %s103 = sand.u32 %s35, 1
          %s104 = smul.addr %s103, 64
          %s105 = scalar_lea.vmem [#allocation2], %s104
          %s107 = ssub.s32 1024, 1024
          %108 = vsyncadd %s102, %s107
          %s109 = smul.addr %s20, 8
          %s110 = smul.addr %s109, 128
          %s111 = scalar_lea.hbm %s0, %s110
          %s112 = sshll.u32 %s105, 4
          %s113 = int_to_ptr.vmem [resolvable:$true] %s112
          %118 = dma.hbm_to_vmem [thread:$0]  %s111, 1024, %s113, %s102, 128, 128, 8
        $region20: #{tpu_custom_call.1} parent=15 // pred_fallthru
          _
      $region16: #{tpu_custom_call.1} parent=5 // pred_fallthru
        _
      %p119 = scmp.le.s32.totalorder 1, %s13
      %p120 = scmp.lt.s32.totalorder %s13, 7
      %p121 = pnand %p119, %p120
      %p122 = pneg %p121
      // Predicated region
      $region21: #{tpu_custom_call.1} parent=5 // pred_check
        _
      $region22: #{tpu_custom_call.1} parent=5 // pred_check_branch
        %124 = sbr.rel (%p121) target = $region24
      $region23: #{tpu_custom_call.1} parent=5 // pred_region
        %s125 = ssub.s32 %s13, 1
        %s126 = sand.u32 %s38, 1
        %s127 = scalar_lea.sflag [#allocation3], %s126
        %s128 = sand.u32 %s38, 1
        %s129 = smul.addr %s128, 64
        %s130 = scalar_lea.vmem [#allocation2], %s129
        // Predicated region
        $region25: #{tpu_custom_call.1} parent=23 // pred_check
          %p131 = pneg %p51
        $region26: #{tpu_custom_call.1} parent=23 // pred_check_branch
          %133 = sbr.rel (%p131) target = $region28
        $region27: #{tpu_custom_call.1} parent=23 // pred_region
          %134 = dma.done %s127, 1024
        $region28: #{tpu_custom_call.1} parent=23 // pred_fallthru
          _
        %s135 = sand.u32 %s38, 1
        %s136 = scalar_lea.sflag [#allocation3], %s135
        %s137 = sand.u32 %s38, 1
        %s138 = smul.addr %s137, 64
        %s139 = scalar_lea.vmem [#allocation2], %s138
        %p140 = pneg %p51
        %p141 = pneg %p48
        %p142 = pneg %p79
        %p143 = pneg %p76
        %s144 = sand.u32 %s66, 1
        %s145 = scalar_lea.sflag [#allocation4], %s144
        %s146 = sand.u32 %s66, 1
        %s147 = smul.addr %s146, 8
        %s148 = scalar_lea.vmem [#allocation5], %s147
        %s149 = smul.u32 %s23, 4
        %s150 = scalar_lea.vmem %s130, %s149 [#allocation2]
        %v151 = vld [vmem:[%s150] sm:$0xff]
        %v152 = vld [vmem:[%s150 + $0x10] sm:$0xff]
        %v153 = vld [vmem:[%s150 + $0x20] sm:$0xff]
        %v154 = vld [vmem:[%s150 + $0x30] sm:$0xff]
        %v159 = vrot.slane %v152, 7
        %vm160 = vcmask 1041409
        %v161 = vsel %vm160, %v159, %v151
        %v162 = vrot.slane %v153, 6
        %vm163 = vcmask 1042434
        %v164 = vsel %vm163, %v162, %v161
        %v165 = vrot.slane %v154, 5
        %vm166 = vcmask 1043459
        %v167 = vsel %vm166, %v165, %v164
        %v169 = vrot.slane %v151, 1
        %v170 = vsel %vm160, %v152, %v169
        %v171 = vrot.slane %v153, 7
        %v172 = vsel %vm163, %v171, %v170
        %v173 = vrot.slane %v154, 6
        %v174 = vsel %vm166, %v173, %v172
        %175 = vrot.lane.b32.xlu0 %v174, 8
        %v176 = vpop.permute.xlu0 %175
        %v178 = vrot.slane %v151, 2
        %v179 = vrot.slane %v152, 1
        %v180 = vsel %vm160, %v179, %v178
        %v181 = vsel %vm163, %v153, %v180
        %v182 = vrot.slane %v154, 7
        %v183 = vsel %vm166, %v182, %v181
        %184 = vrot.lane.b32.xlu0 %v183, 16
        %v185 = vpop.permute.xlu0 %184
        %v187 = vrot.slane %v151, 3
        %v188 = vrot.slane %v152, 2
        %v189 = vsel %vm160, %v188, %v187
        %v190 = vrot.slane %v153, 1
        %v191 = vsel %vm163, %v190, %v189
        %v192 = vsel %vm166, %v154, %v191
        %193 = vrot.lane.b32.xlu0 %v192, 24
        %v194 = vpop.permute.xlu0 %193
        %v196 = vrot.slane %v151, 4
        %v197 = vrot.slane %v152, 3
        %v198 = vsel %vm160, %v197, %v196
        %v199 = vrot.slane %v153, 2
        %v200 = vsel %vm163, %v199, %v198
        %v201 = vrot.slane %v154, 1
        %v202 = vsel %vm166, %v201, %v200
        %203 = vrot.lane.b32.xlu0 %v202, 32
        %v204 = vpop.permute.xlu0 %203
        %v206 = vrot.slane %v151, 5
        %v207 = vrot.slane %v152, 4
        %v208 = vsel %vm160, %v207, %v206
        %v209 = vrot.slane %v153, 3
        %v210 = vsel %vm163, %v209, %v208
        %v211 = vrot.slane %v154, 2
        %v212 = vsel %vm166, %v211, %v210
        %213 = vrot.lane.b32.xlu0 %v212, 40
        %v214 = vpop.permute.xlu0 %213
        %v216 = vrot.slane %v151, 6
        %v217 = vrot.slane %v152, 5
        %v218 = vsel %vm160, %v217, %v216
        %v219 = vrot.slane %v153, 4
        %v220 = vsel %vm163, %v219, %v218
        %v221 = vrot.slane %v154, 3
        %v222 = vsel %vm166, %v221, %v220
        %223 = vrot.lane.b32.xlu0 %v222, 48
        %v224 = vpop.permute.xlu0 %223
        %v226 = vrot.slane %v151, 7
        %v227 = vrot.slane %v152, 6
        %v228 = vsel %vm160, %v227, %v226
        %v229 = vrot.slane %v153, 5
        %v230 = vsel %vm163, %v229, %v228
        %v231 = vrot.slane %v154, 4
        %v232 = vsel %vm166, %v231, %v230
        %233 = vrot.lane.b32.xlu0 %v232, 56
        %v234 = vpop.permute.xlu0 %233
        %236 = vrot.lane.b32.xlu0 %v167, 60
        %v237 = vpop.permute.xlu0 %236
        %239 = vrot.lane.b32.xlu0 %v174, 68
        %v240 = vpop.permute.xlu0 %239
        %242 = vrot.lane.b32.xlu0 %v183, 76
        %v243 = vpop.permute.xlu0 %242
        %245 = vrot.lane.b32.xlu0 %v192, 84
        %v246 = vpop.permute.xlu0 %245
        %248 = vrot.lane.b32.xlu0 %v202, 92
        %v249 = vpop.permute.xlu0 %248
        %251 = vrot.lane.b32.xlu0 %v212, 100
        %v252 = vpop.permute.xlu0 %251
        %254 = vrot.lane.b32.xlu0 %v222, 108
        %v255 = vpop.permute.xlu0 %254
        %257 = vrot.lane.b32.xlu0 %v232, 116
        %v258 = vpop.permute.xlu0 %257
        %vm260 = vcmask 64512
        %v261 = vsel %vm260, %v167, %v176
        %vm262 = vcmask 130048
        %v263 = vsel %vm262, %v261, %v185
        %vm264 = vcmask 195584
        %v265 = vsel %vm264, %v263, %v194
        %vm266 = vcmask 261120
        %v267 = vsel %vm266, %v265, %v204
        %vm268 = vcmask 326656
        %v269 = vsel %vm268, %v267, %v214
        %vm270 = vcmask 392192
        %v271 = vsel %vm270, %v269, %v224
        %vm272 = vcmask 457728
        %v273 = vsel %vm272, %v271, %v234
        %vm274 = vcmask 523264
        %v275 = vsel %vm274, %v273, %v237
        %vm276 = vcmask 588800
        %v277 = vsel %vm276, %v275, %v240
        %vm278 = vcmask 654336
        %v279 = vsel %vm278, %v277, %v243
        %vm280 = vcmask 719872
        %v281 = vsel %vm280, %v279, %v246
        %vm282 = vcmask 785408
        %v283 = vsel %vm282, %v281, %v249
        %vm284 = vcmask 850944
        %v285 = vsel %vm284, %v283, %v252
        %vm286 = vcmask 916480
        %v287 = vsel %vm286, %v285, %v255
        %vm288 = vcmask 982016
        %v289 = vsel %vm288, %v287, %v258
        %290 = vrot.lane.b32.xlu0 %v167, 120
        %v291 = vpop.permute.xlu0 %290
        %294 = vrot.lane.b32.xlu0 %v183, 8
        %v295 = vpop.permute.xlu0 %294
        %297 = vrot.lane.b32.xlu0 %v192, 16
        %v298 = vpop.permute.xlu0 %297
        %300 = vrot.lane.b32.xlu0 %v202, 24
        %v301 = vpop.permute.xlu0 %300
        %303 = vrot.lane.b32.xlu0 %v212, 32
        %v304 = vpop.permute.xlu0 %303
        %306 = vrot.lane.b32.xlu0 %v222, 40
        %v307 = vpop.permute.xlu0 %306
        %309 = vrot.lane.b32.xlu0 %v232, 48
        %v310 = vpop.permute.xlu0 %309
        %v312 = vsel %vm260, %v291, %v174
        %v313 = vsel %vm262, %v312, %v295
        %v314 = vsel %vm264, %v313, %v298
        %v315 = vsel %vm266, %v314, %v301
        %v316 = vsel %vm268, %v315, %v304
        %v317 = vsel %vm270, %v316, %v307
        %v318 = vsel %vm272, %v317, %v310
        %v321 = vcombine.low %v289, %v318
        %v323 = vunpack.c.l.s4 1966171168
        %v324 = vunpack.c.0.s8 %v323
        %v325 = vlaneseq
        %v326 = vshrl.u32 %v325, 7
        %v327 = vsub.s32 %v324, %v326
        %v328 = vrot.slane %v321, %v327
        %v329 = vcombine.high %v328, %v328
        %v331 = vunpack.c.l.s4 1966171168
        %v332 = vunpack.c.0.s8 %v331
        %v333 = vlaneseq
        %v334 = vshrl.u32 %v333, 7
        %v335 = vsub.s32 %v332, %v334
        %v336 = vrot.slane %v328, %v335
        %v338 = vunpack.c.l.s4 1966171168
        %v339 = vunpack.c.0.s8 %v338
        %v340 = vlaneseq
        %v341 = vshrl.u32 %v340, 7
        %v342 = vsub.s32 %v339, %v341
        %v343 = vrot.slane %v329, %v342
        %v344 = vcombine.high %v336, %v336
        %v345 = vcombine.high %v343, %v343
        %v350 = vlaneseq
        %vm351 = vcmp.ge.s32.totalorder %v350, 0
        %vm352 = vcmp.lt.s32.totalorder %v350, 192
        %vm353 = vmand %vm351, %vm352
        %354 = vst.msk [vmem:[%s148] sm:$0x3] %vm353, %v336
        %355 = vst.msk [vmem:[%s148 + $0x2] sm:$0x3] %vm353, %v343
        %356 = vst.msk [vmem:[%s148 + $0x4] sm:$0x3] %vm353, %v344
        %357 = vst.msk [vmem:[%s148 + $0x6] sm:$0x3] %vm353, %v345
        %s358 = sand.u32 %s66, 1
        %s359 = scalar_lea.sflag [#allocation4], %s358
        %s360 = sand.u32 %s66, 1
        %s361 = smul.addr %s360, 8
        %s362 = scalar_lea.vmem [#allocation5], %s361
        // Predicated region
        $region29: #{tpu_custom_call.1} parent=23 // pred_check
          %p363 = pneg %p76
        $region30: #{tpu_custom_call.1} parent=23 // pred_check_branch
          %365 = sbr.rel (%p363) target = $region32
        $region31: #{tpu_custom_call.1} parent=23 // pred_region
          %s367 = ssub.s32 128, 128
          %368 = vsyncadd %s359, %s367
          %s369 = smul.addr %s23, 2
          %s370 = smul.addr %s22, 24
          %s371 = sadd.s32 %s369, %s370
          %s372 = smul.addr %s371, 16
          %s373 = scalar_lea.hbm %s1, %s372
          %s374 = sshll.u32 %s362, 4
          %s375 = int_to_ptr.vmem [resolvable:$true] %s374
          %380 = dma.vmem_to_hbm [thread:$0]  %s375, 128, %s373, %s359, 32, 96, 2
        $region32: #{tpu_custom_call.1} parent=23 // pred_fallthru
          _
      $region24: #{tpu_custom_call.1} parent=5 // pred_fallthru
        _
      %p381 = scmp.le.s32.totalorder 2, %s13
      // Predicated region
      $region33: #{tpu_custom_call.1} parent=5 // pred_check
        %p382 = pneg %p381
      $region34: #{tpu_custom_call.1} parent=5 // pred_check_branch
        %384 = sbr.rel (%p382) target = $region36
      $region35: #{tpu_custom_call.1} parent=5 // pred_region
        %s385 = ssub.s32 %s13, 2
        // Predicated region
        $region37: #{tpu_custom_call.1} parent=35 // pred_check
          %p386 = pneg %p82
        $region38: #{tpu_custom_call.1} parent=35 // pred_check_branch
          %388 = sbr.rel (%p386) target = $region40
        $region39: #{tpu_custom_call.1} parent=35 // pred_region
          %s389 = sand.u32 %s67, 1
          %s390 = scalar_lea.sflag [#allocation4], %s389
          %s391 = sand.u32 %s67, 1
          %s392 = smul.addr %s391, 8
          %s393 = scalar_lea.vmem [#allocation5], %s392
          %394 = dma.done %s390, 128
        $region40: #{tpu_custom_call.1} parent=35 // pred_fallthru
          _
      $region36: #{tpu_custom_call.1} parent=5 // pred_fallthru
        _
    $region6: #{tpu_custom_call.1} parent=1 // loop_footer
      %s17 = sadd.s32 1, %s13
    $region7: #{tpu_custom_call.1} parent=1 // loop_footer_branch
      %12 = sbr.rel target = $region3
    $region8: #{tpu_custom_call.1} parent=1 // loop_exit
      _
    %395 = vsyncpa [#allocation3], 1
    %s396 = scalar_lea.sflag [#allocation3], 1
    %397 = vsyncpa %s396, 1
    %398 = vsyncpa [#allocation4], 1
    %s399 = scalar_lea.sflag [#allocation4], 1
    %400 = vsyncpa %s399, 1

</llo_original>
